<compile_context>
chip_gen: v7x
topology: tpu7x:2x2x1
jax: 0.10.0
libtpu: 0.0.40
codegen_flags: <defaults>
</compile_context>

<pallas_src>
import functools

import jax
import jax.numpy as jnp
from jax.experimental import pallas as pl
from jax.experimental.pallas import tpu as pltpu


LANE_PAD = 128  # lane-dense width for the final (hidden, 1) layer's output


def _round_up(v, m):
    return (v + m - 1) // m * m


# ----------------------------------------------------------------------------
# Kernel: fused MLP, xa = cat([x, a], 1) already concatenated in the wrapper.
#   refs = (w0, b0, w1, b1, ..., wL, bL, out_ref)
# ----------------------------------------------------------------------------
def _qnet_kernel(xa_ref, *refs):
    out_ref = refs[-1]
    params = refs[:-1]
    n_layers = len(params) // 2

    h = xa_ref[...]  # bf16 (tb, obs+act)
    for i in range(n_layers):
        w = params[2 * i][...]                         # bf16 (in, out)
        b = params[2 * i + 1][...]                     # f32  (1, out)
        acc = jnp.dot(h, w, preferred_element_type=jnp.float32) + b
        if i < n_layers - 1:
            # Fused ReLU + bf16 downcast: one elementwise pass, bf16-resident
            # hidden activation feeding the next MXU matmul.
            h = jnp.maximum(acc, 0.0).astype(jnp.bfloat16)
        else:
            out_ref[...] = acc.astype(out_ref.dtype)


# ----------------------------------------------------------------------------
# One-time parameter preparation (hoisted out of the per-call path).
# ----------------------------------------------------------------------------
def prepare_params(params):
    """params: list of (W, b) with W (in, out), b (out,).

    Returns a flat tuple (w0, b0, w1, b1, ...) with weights in bf16, biases as
    (1, out) f32, and the final layer lane-padded to LANE_PAD outputs.
    """
    n = len(params)
    flat = []
    for i, (w, b) in enumerate(params):
        w = jnp.asarray(w, jnp.float32)
        b = jnp.asarray(b, jnp.float32).reshape(1, -1)
        if i == n - 1:
            pad = LANE_PAD - w.shape[1]
            w = jnp.pad(w, ((0, 0), (0, pad)))
            b = jnp.pad(b, ((0, 0), (0, pad)))
        flat.append(w.astype(jnp.bfloat16))
        flat.append(b)
    return tuple(flat)


# ----------------------------------------------------------------------------
# Wrapper
# ----------------------------------------------------------------------------
def soft_q_forward(x, a, flat_params, *, out_dim=1, tb=2048,
                   vmem_limit_bytes=32 * 1024 * 1024):
    """Forward pass.  flat_params must come from prepare_params()."""
    B = x.shape[0]

    # Single fused concat + bf16 cast of the (B, obs+act) input (tiny).
    xa = jnp.concatenate([x.astype(jnp.float32), a.astype(jnp.float32)],
                         axis=1).astype(jnp.bfloat16)
    in_dim = xa.shape[1]

    # Sublane-aligned batch tile.  min(tb, round_up(ceil(B/2), 8)) guarantees
    # at least 2 grid steps for large B (megacore sharding on v7x), while tiny
    # batches collapse to one 8-row tile.
    tb = _round_up(max(tb, 8), 8)
    tb_eff = min(tb, _round_up(-(-B // 2), 8))
    B_pad = _round_up(B, tb_eff)
    if B_pad != B:
        xa = jnp.pad(xa, ((0, B_pad - B), (0, 0)))
    n_tiles = B_pad // tb_eff

    in_specs = [pl.BlockSpec((tb_eff, in_dim), lambda g: (g, 0))]
    for p in flat_params:
        # Constant index_map -> weights/biases stay VMEM-resident across tiles.
        in_specs.append(pl.BlockSpec(p.shape, lambda g: (0, 0)))

    out_shape = jax.ShapeDtypeStruct((B_pad, LANE_PAD), jnp.float32)
    out_spec = pl.BlockSpec((tb_eff, LANE_PAD), lambda g: (g, 0))

    weights = flat_params[0::2]
    flops = sum(2 * B_pad * w.shape[0] * w.shape[1] for w in weights)
    bytes_accessed = (
        int(xa.size) * 2
        + B_pad * LANE_PAD * 4
        + sum(int(p.size) * p.dtype.itemsize for p in flat_params)
    )
    cost = pl.CostEstimate(flops=flops, transcendentals=0,
                           bytes_accessed=bytes_accessed)

    out = pl.pallas_call(
        _qnet_kernel,
        out_shape=out_shape,
        grid=(n_tiles,),
        in_specs=in_specs,
        out_specs=out_spec,
        compiler_params=pltpu.CompilerParams(
            dimension_semantics=("parallel",),
            vmem_limit_bytes=vmem_limit_bytes,
        ),
        cost_estimate=cost,
    )(xa, *flat_params)

    return out[:B, :out_dim]


# ----------------------------------------------------------------------------
# Deterministic parameter init (matches nn.Linear default: U(-k, k), k=1/sqrt(in))
# ----------------------------------------------------------------------------
def init_params(key, obs_dim, act_dim, q_depth, hidden=256):
    input_dim = obs_dim + act_dim
    in_dims = [input_dim] + [hidden] * q_depth
    out_dims = [hidden] * q_depth + [1]
    params = []
    for in_d, out_d in zip(in_dims, out_dims):
        key, kw, kb = jax.random.split(key, 3)
        bound = 1.0 / jnp.sqrt(jnp.float32(in_d))
        w = jax.random.uniform(kw, (in_d, out_d), jnp.float32, -bound, bound)
        b = jax.random.uniform(kb, (out_d,), jnp.float32, -bound, bound)
        params.append((w, b))
    return params


def reference_forward(x, a, params):
    h = jnp.concatenate([x.astype(jnp.float32), a.astype(jnp.float32)], axis=1)
    for i, (w, b) in enumerate(params):
        h = h @ w + b
        if i < len(params) - 1:
            h = jnp.maximum(h, 0.0)
    return h


if __name__ == "__main__":
    key = jax.random.PRNGKey(0)
    k_obs, k_act, k_par, k_obs2, k_act2 = jax.random.split(key, 5)

    batch = 2
    obs_dim = 16
    act_dim = 8
    q_depth = 2          # cfg.sac.q_depth
    hidden = 256

    params = init_params(k_par, obs_dim, act_dim, q_depth, hidden)
    flat_params = prepare_params(params)          # one-time weight prep

    q_forward = jax.jit(
        functools.partial(soft_q_forward, out_dim=1),
        static_argnames=("tb",),
    )

    # Small "single env step"-like batch.
    obs = jax.random.normal(k_obs, (batch, obs_dim), jnp.float32)
    act = jax.random.normal(k_act, (batch, act_dim), jnp.float32)
    out = jax.block_until_ready(q_forward(obs, act, flat_params))
    ref = reference_forward(obs, act, params)
    assert out.shape == (batch, 1), out.shape
    # bf16 MXU inputs with f32 accumulation -> allow small deviation from f32 ref.
    assert jnp.allclose(out, ref, atol=2e-2, rtol=2e-2), (out, ref)

    # Multi-tile path: exercises batch tiling + padding + >=2 grid steps.
    batch2 = 200
    obs2 = jax.random.normal(k_obs2, (batch2, obs_dim), jnp.float32)
    act2 = jax.random.normal(k_act2, (batch2, act_dim), jnp.float32)
    out2 = jax.block_until_ready(q_forward(obs2, act2, flat_params, tb=128))
    ref2 = reference_forward(obs2, act2, params)
    assert out2.shape == (batch2, 1), out2.shape
    assert jnp.allclose(out2, ref2, atol=2e-2, rtol=2e-2)

    print("KERNEL_OK")
</pallas_src>

<mosaic_0001>
module attributes {stable_mosaic.version = 11 : i64} {
  func.func @_qnet_kernel(%arg0: i32, %arg1: memref<8x24xbf16, #tpu.memory_space<vmem>>, %arg2: memref<24x256xbf16, #tpu.memory_space<vmem>>, %arg3: memref<1x256xf32, #tpu.memory_space<vmem>>, %arg4: memref<256x256xbf16, #tpu.memory_space<vmem>>, %arg5: memref<1x256xf32, #tpu.memory_space<vmem>>, %arg6: memref<256x128xbf16, #tpu.memory_space<vmem>>, %arg7: memref<1x128xf32, #tpu.memory_space<vmem>>, %arg8: memref<8x128xf32, #tpu.memory_space<vmem>>) attributes {dimension_semantics = [#tpu.dimension_semantics<parallel>], iteration_bounds = array<i64: 1>, scalar_prefetch = 0 : i64, scratch_operands = 0 : i64, tpu.core_type = #tpu.core_type<tc>, window_params = [{transform_indices = @transform_0, window_bounds = array<i64: 8, 24>}, {pipeline_mode = #tpu.pipeline_mode<synchronous>, transform_indices = @transform_1, window_bounds = array<i64: 24, 256>}, {pipeline_mode = #tpu.pipeline_mode<synchronous>, transform_indices = @transform_2, window_bounds = array<i64: 1, 256>}, {pipeline_mode = #tpu.pipeline_mode<synchronous>, transform_indices = @transform_3, window_bounds = array<i64: 256, 256>}, {pipeline_mode = #tpu.pipeline_mode<synchronous>, transform_indices = @transform_4, window_bounds = array<i64: 1, 256>}, {pipeline_mode = #tpu.pipeline_mode<synchronous>, transform_indices = @transform_5, window_bounds = array<i64: 256, 128>}, {pipeline_mode = #tpu.pipeline_mode<synchronous>, transform_indices = @transform_6, window_bounds = array<i64: 1, 128>}, {transform_indices = @transform_7, window_bounds = array<i64: 8, 128>}]} {
    %c0 = arith.constant 0 : index
    %c0_0 = arith.constant 0 : index
    %0 = vector.load %arg1[%c0, %c0_0] : memref<8x24xbf16, #tpu.memory_space<vmem>>, vector<8x24xbf16>
    %c0_1 = arith.constant 0 : index
    %c0_2 = arith.constant 0 : index
    %1 = vector.load %arg2[%c0_1, %c0_2] : memref<24x256xbf16, #tpu.memory_space<vmem>>, vector<24x256xbf16>
    %c0_3 = arith.constant 0 : index
    %c0_4 = arith.constant 0 : index
    %2 = vector.load %arg3[%c0_3, %c0_4] : memref<1x256xf32, #tpu.memory_space<vmem>>, vector<1x256xf32>
    %cst = arith.constant dense<0.000000e+00> : vector<8x256xf32>
    %3 = tpu.matmul %0, %1, %cst {dimension_numbers = #tpu.dot_dimension_numbers<[1], [0], [0], [1], [0, 0, 1, 1], [], []>} : vector<8x24xbf16>, vector<24x256xbf16>, vector<8x256xf32> -> vector<8x256xf32>
    %4 = vector.broadcast %2 : vector<1x256xf32> to vector<8x256xf32>
    %5 = arith.addf %3, %4 : vector<8x256xf32>
    %cst_5 = arith.constant 0.000000e+00 : f32
    %6 = vector.broadcast %cst_5 : f32 to vector<8x256xf32>
    %7 = arith.maximumf %5, %6 : vector<8x256xf32>
    %8 = arith.truncf %7 : vector<8x256xf32> to vector<8x256xbf16>
    %c0_6 = arith.constant 0 : index
    %c0_7 = arith.constant 0 : index
    %9 = vector.load %arg4[%c0_6, %c0_7] : memref<256x256xbf16, #tpu.memory_space<vmem>>, vector<256x256xbf16>
    %c0_8 = arith.constant 0 : index
    %c0_9 = arith.constant 0 : index
    %10 = vector.load %arg5[%c0_8, %c0_9] : memref<1x256xf32, #tpu.memory_space<vmem>>, vector<1x256xf32>
    %cst_10 = arith.constant dense<0.000000e+00> : vector<8x256xf32>
    %11 = tpu.matmul %8, %9, %cst_10 {dimension_numbers = #tpu.dot_dimension_numbers<[1], [0], [0], [1], [0, 0, 1, 1], [], []>} : vector<8x256xbf16>, vector<256x256xbf16>, vector<8x256xf32> -> vector<8x256xf32>
    %12 = vector.broadcast %10 : vector<1x256xf32> to vector<8x256xf32>
    %13 = arith.addf %11, %12 : vector<8x256xf32>
    %cst_11 = arith.constant 0.000000e+00 : f32
    %14 = vector.broadcast %cst_11 : f32 to vector<8x256xf32>
    %15 = arith.maximumf %13, %14 : vector<8x256xf32>
    %16 = arith.truncf %15 : vector<8x256xf32> to vector<8x256xbf16>
    %c0_12 = arith.constant 0 : index
    %c0_13 = arith.constant 0 : index
    %17 = vector.load %arg6[%c0_12, %c0_13] : memref<256x128xbf16, #tpu.memory_space<vmem>>, vector<256x128xbf16>
    %c0_14 = arith.constant 0 : index
    %c0_15 = arith.constant 0 : index
    %18 = vector.load %arg7[%c0_14, %c0_15] : memref<1x128xf32, #tpu.memory_space<vmem>>, vector<1x128xf32>
    %cst_16 = arith.constant dense<0.000000e+00> : vector<8x128xf32>
    %19 = tpu.matmul %16, %17, %cst_16 {dimension_numbers = #tpu.dot_dimension_numbers<[1], [0], [0], [1], [0, 0, 1, 1], [], []>} : vector<8x256xbf16>, vector<256x128xbf16>, vector<8x128xf32> -> vector<8x128xf32>
    %20 = vector.broadcast %18 : vector<1x128xf32> to vector<8x128xf32>
    %21 = arith.addf %19, %20 : vector<8x128xf32>
    %c0_17 = arith.constant 0 : index
    %c0_18 = arith.constant 0 : index
    %22 = vector.load %arg8[%c0_17, %c0_18] : memref<8x128xf32, #tpu.memory_space<vmem>>, vector<8x128xf32>
    tpu.vector_store %arg8[%c0_17, %c0_18], %21 {strides = array<i32>} : memref<8x128xf32, #tpu.memory_space<vmem>>, vector<8x128xf32>,
    return
  }
  func.func @transform_0(%arg0: i32) -> (i32, i32) {
    %c0_i32 = arith.constant 0 : i32
    %c0_i32_0 = arith.constant 0 : i32
    return %arg0, %c0_i32 : i32, i32
  }
  func.func @transform_1(%arg0: i32) -> (i32, i32) {
    %c0_i32 = arith.constant 0 : i32
    %c0_i32_0 = arith.constant 0 : i32
    %c0_i32_1 = arith.constant 0 : i32
    return %c0_i32, %c0_i32_0 : i32, i32
  }
  func.func @transform_2(%arg0: i32) -> (i32, i32) {
    %c0_i32 = arith.constant 0 : i32
    %c0_i32_0 = arith.constant 0 : i32
    %c0_i32_1 = arith.constant 0 : i32
    return %c0_i32, %c0_i32_0 : i32, i32
  }
  func.func @transform_3(%arg0: i32) -> (i32, i32) {
    %c0_i32 = arith.constant 0 : i32
    %c0_i32_0 = arith.constant 0 : i32
    %c0_i32_1 = arith.constant 0 : i32
    return %c0_i32, %c0_i32_0 : i32, i32
  }
  func.func @transform_4(%arg0: i32) -> (i32, i32) {
    %c0_i32 = arith.constant 0 : i32
    %c0_i32_0 = arith.constant 0 : i32
    %c0_i32_1 = arith.constant 0 : i32
    return %c0_i32, %c0_i32_0 : i32, i32
  }
  func.func @transform_5(%arg0: i32) -> (i32, i32) {
    %c0_i32 = arith.constant 0 : i32
    %c0_i32_0 = arith.constant 0 : i32
    %c0_i32_1 = arith.constant 0 : i32
    return %c0_i32, %c0_i32_0 : i32, i32
  }
  func.func @transform_6(%arg0: i32) -> (i32, i32) {
    %c0_i32 = arith.constant 0 : i32
    %c0_i32_0 = arith.constant 0 : i32
    %c0_i32_1 = arith.constant 0 : i32
    return %c0_i32, %c0_i32_0 : i32, i32
  }
  func.func @transform_7(%arg0: i32) -> (i32, i32) {
    %c0_i32 = arith.constant 0 : i32
    %c0_i32_0 = arith.constant 0 : i32
    return %arg0, %c0_i32 : i32, i32
  }
}

</mosaic_0001>

<llo_original>
// kernel: soft_q_forward.1
$region0: #{soft_q_forward.1}
  #allocation0 [shape = 'u32[]', space=smem, size = 0x4, offset = 0x4, fixed_abs, tag = 'smem constant byte address 0x4 - core index']
  #allocation1 [shape = 'u32[144,128]{1,0:T(1,128)}', space=vmem, size = 0x12000, scoped, tag = 'internal scratch']
  %s0 = inlined_call_operand.vmem [shape: bf16[8,24], index: 0, kind: input, shape index: {}]
  %s1 = inlined_call_operand.hbm [shape: bf16[24,256], index: 1, kind: input, shape index: {}]
  %s2 = inlined_call_operand.vmem [shape: f32[1,256], index: 2, kind: input, shape index: {}]
  %s3 = inlined_call_operand.hbm [shape: bf16[256,256], index: 3, kind: input, shape index: {}]
  %s4 = inlined_call_operand.vmem [shape: f32[1,256], index: 4, kind: input, shape index: {}]
  %s5 = inlined_call_operand.hbm [shape: bf16[256,128], index: 5, kind: input, shape index: {}]
  %s6 = inlined_call_operand.vmem [shape: f32[1,128], index: 6, kind: input, shape index: {}]
  %s7 = inlined_call_operand.vmem [shape: f32[8,128], index: 7, kind: output, shape index: {}]
  %s8 = sld [smem:[#allocation0]]
  $region50: #{soft_q_forward.1} parent=0
    _
  %s10 = ssub.s32 1, %s8
  %s11 = scalar_select 0, %s10, %s8
  $region1: #{soft_q_forward.1} parent=0
    #allocation2 [shape = 'u8[12288]{0}', space=vmem, size = 0x3000, scoped, tag = 'input window, operand 1, single buffered']
    #allocation3 [shape = 's32[1]{0}', space=sflag, size = 0x4, scoped, tag = 'scoped memory for soft_q_forward.1']
    #allocation4 [shape = 'u8[131072]{0}', space=vmem, size = 0x20000, scoped, tag = 'input window, operand 3, single buffered']
    #allocation5 [shape = 's32[1]{0}', space=sflag, size = 0x4, scoped, tag = 'scoped memory for soft_q_forward.1']
    #allocation6 [shape = 'u8[65536]{0}', space=vmem, size = 0x10000, scoped, tag = 'input window, operand 5, single buffered']
    %12 = vsyncpa [#allocation3], 0
    %13 = vsyncpa [#allocation5], 0
    // Predicated region
    $region2: #{soft_q_forward.1} parent=1 // pred_check
      _
    $region3: #{soft_q_forward.1} parent=1 // pred_check_branch
      %15 = sbr.rel (0) target = $region5
    $region4: #{soft_q_forward.1} parent=1 // pred_region
      _
    $region5: #{soft_q_forward.1} parent=1 // pred_fallthru
      _
    // Predicated region
    $region6: #{soft_q_forward.1} parent=1 // pred_check
      _
    $region7: #{soft_q_forward.1} parent=1 // pred_check_branch
      %17 = sbr.rel (0) target = $region9
    $region8: #{soft_q_forward.1} parent=1 // pred_region
      %s19 = ssub.s32 384, 384
      %20 = vsyncadd [#allocation3], %s19
      %s21 = sshll.u32 [#allocation2], 4
      %s22 = int_to_ptr.vmem [resolvable:$true] %s21
      %27 = dma.hbm_to_vmem [thread:$0]  %s1, 384, %s22, [#allocation3], 128, 128, 8
    $region9: #{soft_q_forward.1} parent=1 // pred_fallthru
      _
    // Predicated region
    $region10: #{soft_q_forward.1} parent=1 // pred_check
      _
    $region11: #{soft_q_forward.1} parent=1 // pred_check_branch
      %29 = sbr.rel (0) target = $region13
    $region12: #{soft_q_forward.1} parent=1 // pred_region
      _
    $region13: #{soft_q_forward.1} parent=1 // pred_fallthru
      _
    // Predicated region
    $region14: #{soft_q_forward.1} parent=1 // pred_check
      _
    $region15: #{soft_q_forward.1} parent=1 // pred_check_branch
      %31 = sbr.rel (0) target = $region17
    $region16: #{soft_q_forward.1} parent=1 // pred_region
      %s33 = ssub.s32 4096, 4096
      %34 = vsyncadd [#allocation5], %s33
      %s35 = sshll.u32 [#allocation4], 4
      %s36 = int_to_ptr.vmem [resolvable:$true] %s35
      %41 = dma.hbm_to_vmem [thread:$0]  %s3, 4096, %s36, [#allocation5], 128, 128, 8
    $region17: #{soft_q_forward.1} parent=1 // pred_fallthru
      _
    // Predicated region
    $region18: #{soft_q_forward.1} parent=1 // pred_check
      _
    $region19: #{soft_q_forward.1} parent=1 // pred_check_branch
      %43 = sbr.rel (0) target = $region21
    $region20: #{soft_q_forward.1} parent=1 // pred_region
      _
    $region21: #{soft_q_forward.1} parent=1 // pred_fallthru
      _
    // Predicated region
    $region22: #{soft_q_forward.1} parent=1 // pred_check
      _
    $region23: #{soft_q_forward.1} parent=1 // pred_check_branch
      %45 = sbr.rel (0) target = $region25
    $region24: #{soft_q_forward.1} parent=1 // pred_region
      %s47 = ssub.s32 2048, 2048
      %48 = vsyncadd [#allocation5], %s47
      %s49 = sshll.u32 [#allocation6], 4
      %s50 = int_to_ptr.vmem [resolvable:$true] %s49
      %55 = dma.hbm_to_vmem [thread:$0]  %s5, 2048, %s50, [#allocation5], 64, 64, 4
    $region25: #{soft_q_forward.1} parent=1 // pred_fallthru
      _
    // Predicated region
    $region26: #{soft_q_forward.1} parent=1 // pred_check
      _
    $region27: #{soft_q_forward.1} parent=1 // pred_check_branch
      %57 = sbr.rel (0) target = $region29
    $region28: #{soft_q_forward.1} parent=1 // pred_region
      _
    $region29: #{soft_q_forward.1} parent=1 // pred_fallthru
      _
    // Predicated region
    $region30: #{soft_q_forward.1} parent=1 // pred_check
      _
    $region31: #{soft_q_forward.1} parent=1 // pred_check_branch
      %59 = sbr.rel (0) target = $region33
    $region32: #{soft_q_forward.1} parent=1 // pred_region
      %60 = dma.done [#allocation3], 384
    $region33: #{soft_q_forward.1} parent=1 // pred_fallthru
      _
    // Predicated region
    $region34: #{soft_q_forward.1} parent=1 // pred_check
      _
    $region35: #{soft_q_forward.1} parent=1 // pred_check_branch
      %62 = sbr.rel (0) target = $region37
    $region36: #{soft_q_forward.1} parent=1 // pred_region
      %63 = dma.done [#allocation5], 4096
    $region37: #{soft_q_forward.1} parent=1 // pred_fallthru
      _
    // Predicated region
    $region38: #{soft_q_forward.1} parent=1 // pred_check
      _
    $region39: #{soft_q_forward.1} parent=1 // pred_check_branch
      %65 = sbr.rel (0) target = $region41
    $region40: #{soft_q_forward.1} parent=1 // pred_region
      %66 = dma.done [#allocation5], 2048
    $region41: #{soft_q_forward.1} parent=1 // pred_fallthru
      _
    %v68 = vld [vmem:[%s0] sm:$0xf]
    %v69 = vld [vmem:[#allocation2] sm:$0xff]
    %v70 = vld [vmem:[#allocation2 + $0x8] sm:$0xff]
    %v71 = vld [vmem:[#allocation2 + $0x10] sm:$0xff]
    %v72 = vld [vmem:[%s2] sm:$0x3]
    %v74 = vlaneseq
    %v75 = vshrl.u32 %v74, 7
    %v76 = vsub.s32 0, %v75
    %v77 = vrot.slane %v72, %v76
    %v78 = vlaneseq
    %v79 = vshrl.u32 %v78, 7
    %v80 = vsub.s32 1, %v79
    %v81 = vrot.slane %v72, %v80
    %v87 = vunpack.c.l.b16 %v69
    %v88 = vunpack.c.h.b16 %v69
    %v89 = vunpack.c.l.b16 %v70
    %v90 = vunpack.c.h.b16 %v70
    %v91 = vunpack.c.l.b16 %v71
    %v92 = vunpack.c.h.b16 %v71
    %v93 = vpack.c.b16 %v89, %v87
    %v94 = vpack.c.b16 %v90, %v88
    %v95 = vpack.c.b16 %v91, %v91
    %v96 = vpack.c.b16 %v92, %v92
    %vm99 = vcmask 195584
    %v101 = vsel %vm99, %v68, 0
    %vm103 = vcmask 1043456
    %v105 = vsel %vm103, %v95, 0
    %v108 = vsel %vm103, %v96, 0
    %110 = vmatprep.subr.bf16.mxu0 %v94
    %111 = vmatpush1.bf16.msra.mxu0 %v93
    %112 = vmatprep.subr.bf16.mxu0 %v108
    %113 = vmatpush1.bf16.msra.mxu0 %v105
    %114 = vmatprep.subr.bf16.mxu0 0
    %115 = vmatpush1.bf16.msra.mxu0 0
    %116 = vmatprep.subr.bf16.mxu0 0
    %117 = vmatpush1.bf16.msra.mxu0 0
    %118 = vmatprep.subr.bf16.mxu0 0
    %119 = vmatpush1.bf16.msra.mxu0 0
    %120 = vmatprep.subr.bf16.mxu0 0
    %121 = vmatpush1.bf16.msra.mxu0 0
    %122 = vmatprep.subr.bf16.mxu0 0
    %123 = vmatpush1.bf16.msra.mxu0 0
    %124 = vmatprep.subr.bf16.mxu0 0
    %125 = vmatpush1.bf16.msra.mxu0 0
    %126 = vmatprep.subr.bf16.mxu0 0
    %127 = vmatpush1.bf16.msra.mxu0 0
    %128 = vmatprep.subr.bf16.mxu0 0
    %129 = vmatpush1.bf16.msra.mxu0 0
    %130 = vmatprep.subr.bf16.mxu0 0
    %131 = vmatpush1.bf16.msra.mxu0 0
    %132 = vmatprep.subr.bf16.mxu0 0
    %133 = vmatpush1.bf16.msra.mxu0 0
    %134 = vmatprep.subr.bf16.mxu0 0
    %135 = vmatpush1.bf16.msra.mxu0 0
    %136 = vmatprep.subr.bf16.mxu0 0
    %137 = vmatpush1.bf16.msra.mxu0 0
    %138 = vmatprep.subr.bf16.mxu0 0
    %139 = vmatpush1.bf16.msra.mxu0 0
    %140 = vmatprep.subr.bf16.mxu0 0
    %141 = vmatpush1.bf16.msra.mxu0 0
    %142 = vmatprep.mubr.bf16.mxu0 0
    %143 = vmatmul.mubr.bf16.gmra.mrb[0].mxu0 %v101
    %v144 = vpop.f32.mrb[0].mxu0
    %v145 = vadd.f32 %v77, %v144
    %v146 = vpop.f32.mrb[0].mxu0
    %v147 = vadd.f32 %v81, %v146
    %v148 = vpop.f32.mrb[0].mxu0
    %v149 = vpop.f32.mrb[0].mxu0
    %150 = vdwg.mxu0
    %v151 = vmax.f32 %v145, 0.0
    %v152 = vmax.f32 %v147, 0.0
    %v153 = vpack.c.bf16 %v151, %v151
    %v154 = vpack.c.bf16 %v152, %v152
    %v155 = vld [vmem:[#allocation4] sm:$0xff]
    %v156 = vld [vmem:[#allocation4 + $0x8] sm:$0xff]
    %v157 = vld [vmem:[#allocation4 + $0x10] sm:$0xff]
    %v158 = vld [vmem:[#allocation4 + $0x18] sm:$0xff]
    %v159 = vld [vmem:[#allocation4 + $0x20] sm:$0xff]
    %v160 = vld [vmem:[#allocation4 + $0x28] sm:$0xff]
    %v161 = vld [vmem:[#allocation4 + $0x30] sm:$0xff]
    %v162 = vld [vmem:[#allocation4 + $0x38] sm:$0xff]
    %v163 = vld [vmem:[#allocation4 + $0x40] sm:$0xff]
    %v164 = vld [vmem:[#allocation4 + $0x48] sm:$0xff]
    %v165 = vld [vmem:[#allocation4 + $0x50] sm:$0xff]
    %v166 = vld [vmem:[#allocation4 + $0x58] sm:$0xff]
    %v167 = vld [vmem:[#allocation4 + $0x60] sm:$0xff]
    %v168 = vld [vmem:[#allocation4 + $0x68] sm:$0xff]
    %v169 = vld [vmem:[#allocation4 + $0x70] sm:$0xff]
    %v170 = vld [vmem:[#allocation4 + $0x78] sm:$0xff]
    %v171 = vld [vmem:[#allocation4 + $0x80] sm:$0xff]
    %v172 = vld [vmem:[#allocation4 + $0x88] sm:$0xff]
    %v173 = vld [vmem:[#allocation4 + $0x90] sm:$0xff]
    %v174 = vld [vmem:[#allocation4 + $0x98] sm:$0xff]
    %v175 = vld [vmem:[#allocation4 + $0xa0] sm:$0xff]
    %v176 = vld [vmem:[#allocation4 + $0xa8] sm:$0xff]
    %v177 = vld [vmem:[#allocation4 + $0xb0] sm:$0xff]
    %v178 = vld [vmem:[#allocation4 + $0xb8] sm:$0xff]
    %v179 = vld [vmem:[#allocation4 + $0xc0] sm:$0xff]
    %v180 = vld [vmem:[#allocation4 + $0xc8] sm:$0xff]
    %v181 = vld [vmem:[#allocation4 + $0xd0] sm:$0xff]
    %v182 = vld [vmem:[#allocation4 + $0xd8] sm:$0xff]
    %v183 = vld [vmem:[#allocation4 + $0xe0] sm:$0xff]
    %v184 = vld [vmem:[#allocation4 + $0xe8] sm:$0xff]
    %v185 = vld [vmem:[#allocation4 + $0xf0] sm:$0xff]
    %v186 = vld [vmem:[#allocation4 + $0xf8] sm:$0xff]
    %v187 = vld [vmem:[%s4] sm:$0x3]
    %v189 = vlaneseq
    %v190 = vshrl.u32 %v189, 7
    %v191 = vsub.s32 0, %v190
    %v192 = vrot.slane %v187, %v191
    %v193 = vlaneseq
    %v194 = vshrl.u32 %v193, 7
    %v195 = vsub.s32 1, %v194
    %v196 = vrot.slane %v187, %v195
    %v231 = vunpack.c.l.b16 %v155
    %v232 = vunpack.c.h.b16 %v155
    %v233 = vunpack.c.l.b16 %v156
    %v234 = vunpack.c.h.b16 %v156
    %v235 = vunpack.c.l.b16 %v157
    %v236 = vunpack.c.h.b16 %v157
    %v237 = vunpack.c.l.b16 %v158
    %v238 = vunpack.c.h.b16 %v158
    %v239 = vunpack.c.l.b16 %v159
    %v240 = vunpack.c.h.b16 %v159
    %v241 = vunpack.c.l.b16 %v160
    %v242 = vunpack.c.h.b16 %v160
    %v243 = vunpack.c.l.b16 %v161
    %v244 = vunpack.c.h.b16 %v161
    %v245 = vunpack.c.l.b16 %v162
    %v246 = vunpack.c.h.b16 %v162
    %v247 = vunpack.c.l.b16 %v163
    %v248 = vunpack.c.h.b16 %v163
    %v249 = vunpack.c.l.b16 %v164
    %v250 = vunpack.c.h.b16 %v164
    %v251 = vunpack.c.l.b16 %v165
    %v252 = vunpack.c.h.b16 %v165
    %v253 = vunpack.c.l.b16 %v166
    %v254 = vunpack.c.h.b16 %v166
    %v255 = vunpack.c.l.b16 %v167
    %v256 = vunpack.c.h.b16 %v167
    %v257 = vunpack.c.l.b16 %v168
    %v258 = vunpack.c.h.b16 %v168
    %v259 = vunpack.c.l.b16 %v169
    %v260 = vunpack.c.h.b16 %v169
    %v261 = vunpack.c.l.b16 %v170
    %v262 = vunpack.c.h.b16 %v170
    %v263 = vunpack.c.l.b16 %v171
    %v264 = vunpack.c.h.b16 %v171
    %v265 = vunpack.c.l.b16 %v172
    %v266 = vunpack.c.h.b16 %v172
    %v267 = vunpack.c.l.b16 %v173
    %v268 = vunpack.c.h.b16 %v173
    %v269 = vunpack.c.l.b16 %v174
    %v270 = vunpack.c.h.b16 %v174
    %v271 = vunpack.c.l.b16 %v175
    %v272 = vunpack.c.h.b16 %v175
    %v273 = vunpack.c.l.b16 %v176
    %v274 = vunpack.c.h.b16 %v176
    %v275 = vunpack.c.l.b16 %v177
    %v276 = vunpack.c.h.b16 %v177
    %v277 = vunpack.c.l.b16 %v178
    %v278 = vunpack.c.h.b16 %v178
    %v279 = vunpack.c.l.b16 %v179
    %v280 = vunpack.c.h.b16 %v179
    %v281 = vunpack.c.l.b16 %v180
    %v282 = vunpack.c.h.b16 %v180
    %v283 = vunpack.c.l.b16 %v181
    %v284 = vunpack.c.h.b16 %v181
    %v285 = vunpack.c.l.b16 %v182
    %v286 = vunpack.c.h.b16 %v182
    %v287 = vunpack.c.l.b16 %v183
    %v288 = vunpack.c.h.b16 %v183
    %v289 = vunpack.c.l.b16 %v184
    %v290 = vunpack.c.h.b16 %v184
    %v291 = vunpack.c.l.b16 %v185
    %v292 = vunpack.c.h.b16 %v185
    %v293 = vunpack.c.l.b16 %v186
    %v294 = vunpack.c.h.b16 %v186
    %v295 = vpack.c.b16 %v233, %v231
    %v296 = vpack.c.b16 %v234, %v232
    %v297 = vpack.c.b16 %v237, %v235
    %v298 = vpack.c.b16 %v238, %v236
    %v299 = vpack.c.b16 %v241, %v239
    %v300 = vpack.c.b16 %v242, %v240
    %v301 = vpack.c.b16 %v245, %v243
    %v302 = vpack.c.b16 %v246, %v244
    %v303 = vpack.c.b16 %v249, %v247
    %v304 = vpack.c.b16 %v250, %v248
    %v305 = vpack.c.b16 %v253, %v251
    %v306 = vpack.c.b16 %v254, %v252
    %v307 = vpack.c.b16 %v257, %v255
    %v308 = vpack.c.b16 %v258, %v256
    %v309 = vpack.c.b16 %v261, %v259
    %v310 = vpack.c.b16 %v262, %v260
    %v311 = vpack.c.b16 %v265, %v263
    %v312 = vpack.c.b16 %v266, %v264
    %v313 = vpack.c.b16 %v269, %v267
    %v314 = vpack.c.b16 %v270, %v268
    %v315 = vpack.c.b16 %v273, %v271
    %v316 = vpack.c.b16 %v274, %v272
    %v317 = vpack.c.b16 %v277, %v275
    %v318 = vpack.c.b16 %v278, %v276
    %v319 = vpack.c.b16 %v281, %v279
    %v320 = vpack.c.b16 %v282, %v280
    %v321 = vpack.c.b16 %v285, %v283
    %v322 = vpack.c.b16 %v286, %v284
    %v323 = vpack.c.b16 %v289, %v287
    %v324 = vpack.c.b16 %v290, %v288
    %v325 = vpack.c.b16 %v293, %v291
    %v326 = vpack.c.b16 %v294, %v292
    %359 = vmatprep.subr.bf16.mxu0 %v296
    %360 = vmatpush1.bf16.msra.mxu0 %v295
    %361 = vmatprep.subr.bf16.mxu0 %v298
    %362 = vmatpush1.bf16.msra.mxu0 %v297
    %363 = vmatprep.subr.bf16.mxu0 %v300
    %364 = vmatpush1.bf16.msra.mxu0 %v299
    %365 = vmatprep.subr.bf16.mxu0 %v302
    %366 = vmatpush1.bf16.msra.mxu0 %v301
    %367 = vmatprep.subr.bf16.mxu0 %v304
    %368 = vmatpush1.bf16.msra.mxu0 %v303
    %369 = vmatprep.subr.bf16.mxu0 %v306
    %370 = vmatpush1.bf16.msra.mxu0 %v305
    %371 = vmatprep.subr.bf16.mxu0 %v308
    %372 = vmatpush1.bf16.msra.mxu0 %v307
    %373 = vmatprep.subr.bf16.mxu0 %v310
    %374 = vmatpush1.bf16.msra.mxu0 %v309
    %375 = vmatprep.subr.bf16.mxu0 %v312
    %376 = vmatpush1.bf16.msra.mxu0 %v311
    %377 = vmatprep.subr.bf16.mxu0 %v314
    %378 = vmatpush1.bf16.msra.mxu0 %v313
    %379 = vmatprep.subr.bf16.mxu0 %v316
    %380 = vmatpush1.bf16.msra.mxu0 %v315
    %381 = vmatprep.subr.bf16.mxu0 %v318
    %382 = vmatpush1.bf16.msra.mxu0 %v317
    %383 = vmatprep.subr.bf16.mxu0 %v320
    %384 = vmatpush1.bf16.msra.mxu0 %v319
    %385 = vmatprep.subr.bf16.mxu0 %v322
    %386 = vmatpush1.bf16.msra.mxu0 %v321
    %387 = vmatprep.subr.bf16.mxu0 %v324
    %388 = vmatpush1.bf16.msra.mxu0 %v323
    %389 = vmatprep.subr.bf16.mxu0 %v326
    %390 = vmatpush1.bf16.msra.mxu0 %v325
    %391 = vmatprep.mubr.bf16.mxu0 %v154
    %392 = vmatmul.mubr.bf16.gmra.mrb[0].mxu0 %v153
    %v393 = vpop.f32.mrb[0].mxu0
    %v394 = vadd.f32 %v192, %v393
    %v395 = vpop.f32.mrb[0].mxu0
    %v396 = vadd.f32 %v196, %v395
    %v397 = vpop.f32.mrb[0].mxu0
    %v398 = vpop.f32.mrb[0].mxu0
    %399 = vdwg.mxu0
    %v400 = vmax.f32 %v394, 0.0
    %v401 = vmax.f32 %v396, 0.0
    %v402 = vpack.c.bf16 %v400, %v400
    %v403 = vpack.c.bf16 %v401, %v401
    %v404 = vld [vmem:[#allocation6] sm:$0xf]
    %v405 = vld [vmem:[#allocation6 + $0x4] sm:$0xf]
    %v406 = vld [vmem:[#allocation6 + $0x8] sm:$0xf]
    %v407 = vld [vmem:[#allocation6 + $0xc] sm:$0xf]
    %v408 = vld [vmem:[#allocation6 + $0x10] sm:$0xf]
    %v409 = vld [vmem:[#allocation6 + $0x14] sm:$0xf]
    %v410 = vld [vmem:[#allocation6 + $0x18] sm:$0xf]
    %v411 = vld [vmem:[#allocation6 + $0x1c] sm:$0xf]
    %v412 = vld [vmem:[#allocation6 + $0x20] sm:$0xf]
    %v413 = vld [vmem:[#allocation6 + $0x24] sm:$0xf]
    %v414 = vld [vmem:[#allocation6 + $0x28] sm:$0xf]
    %v415 = vld [vmem:[#allocation6 + $0x2c] sm:$0xf]
    %v416 = vld [vmem:[#allocation6 + $0x30] sm:$0xf]
    %v417 = vld [vmem:[#allocation6 + $0x34] sm:$0xf]
    %v418 = vld [vmem:[#allocation6 + $0x38] sm:$0xf]
    %v419 = vld [vmem:[#allocation6 + $0x3c] sm:$0xf]
    %v420 = vld [vmem:[#allocation6 + $0x40] sm:$0xf]
    %v421 = vld [vmem:[#allocation6 + $0x44] sm:$0xf]
    %v422 = vld [vmem:[#allocation6 + $0x48] sm:$0xf]
    %v423 = vld [vmem:[#allocation6 + $0x4c] sm:$0xf]
    %v424 = vld [vmem:[#allocation6 + $0x50] sm:$0xf]
    %v425 = vld [vmem:[#allocation6 + $0x54] sm:$0xf]
    %v426 = vld [vmem:[#allocation6 + $0x58] sm:$0xf]
    %v427 = vld [vmem:[#allocation6 + $0x5c] sm:$0xf]
    %v428 = vld [vmem:[#allocation6 + $0x60] sm:$0xf]
    %v429 = vld [vmem:[#allocation6 + $0x64] sm:$0xf]
    %v430 = vld [vmem:[#allocation6 + $0x68] sm:$0xf]
    %v431 = vld [vmem:[#allocation6 + $0x6c] sm:$0xf]
    %v432 = vld [vmem:[#allocation6 + $0x70] sm:$0xf]
    %v433 = vld [vmem:[#allocation6 + $0x74] sm:$0xf]
    %v434 = vld [vmem:[#allocation6 + $0x78] sm:$0xf]
    %v435 = vld [vmem:[#allocation6 + $0x7c] sm:$0xf]
    %v436 = vld [vmem:[%s6] sm:$0x1]
    %v438 = vlaneseq
    %v439 = vshrl.u32 %v438, 7
    %v440 = vsub.s32 0, %v439
    %v441 = vrot.slane %v436, %v440
    %v475 = vunpack.c.l.b16 %v404
    %v476 = vunpack.c.l.b16 %v405
    %v477 = vunpack.c.l.b16 %v406
    %v478 = vunpack.c.l.b16 %v407
    %v479 = vunpack.c.l.b16 %v408
    %v480 = vunpack.c.l.b16 %v409
    %v481 = vunpack.c.l.b16 %v410
    %v482 = vunpack.c.l.b16 %v411
    %v483 = vunpack.c.l.b16 %v412
    %v484 = vunpack.c.l.b16 %v413
    %v485 = vunpack.c.l.b16 %v414
    %v486 = vunpack.c.l.b16 %v415
    %v487 = vunpack.c.l.b16 %v416
    %v488 = vunpack.c.l.b16 %v417
    %v489 = vunpack.c.l.b16 %v418
    %v490 = vunpack.c.l.b16 %v419
    %v491 = vunpack.c.l.b16 %v420
    %v492 = vunpack.c.l.b16 %v421
    %v493 = vunpack.c.l.b16 %v422
    %v494 = vunpack.c.l.b16 %v423
    %v495 = vunpack.c.l.b16 %v424
    %v496 = vunpack.c.l.b16 %v425
    %v497 = vunpack.c.l.b16 %v426
    %v498 = vunpack.c.l.b16 %v427
    %v499 = vunpack.c.l.b16 %v428
    %v500 = vunpack.c.l.b16 %v429
    %v501 = vunpack.c.l.b16 %v430
    %v502 = vunpack.c.l.b16 %v431
    %v503 = vunpack.c.l.b16 %v432
    %v504 = vunpack.c.l.b16 %v433
    %v505 = vunpack.c.l.b16 %v434
    %v506 = vunpack.c.l.b16 %v435
    %v507 = vpack.c.b16 %v476, %v475
    %v508 = vpack.c.b16 %v478, %v477
    %v509 = vpack.c.b16 %v480, %v479
    %v510 = vpack.c.b16 %v482, %v481
    %v511 = vpack.c.b16 %v484, %v483
    %v512 = vpack.c.b16 %v486, %v485
    %v513 = vpack.c.b16 %v488, %v487
    %v514 = vpack.c.b16 %v490, %v489
    %v515 = vpack.c.b16 %v492, %v491
    %v516 = vpack.c.b16 %v494, %v493
    %v517 = vpack.c.b16 %v496, %v495
    %v518 = vpack.c.b16 %v498, %v497
    %v519 = vpack.c.b16 %v500, %v499
    %v520 = vpack.c.b16 %v502, %v501
    %v521 = vpack.c.b16 %v504, %v503
    %v522 = vpack.c.b16 %v506, %v505
    %539 = vmatprep.subr.bf16.mxu0 0
    %540 = vmatpush1.bf16.msra.mxu0 %v507
    %541 = vmatprep.subr.bf16.mxu0 0
    %542 = vmatpush1.bf16.msra.mxu0 %v508
    %543 = vmatprep.subr.bf16.mxu0 0
    %544 = vmatpush1.bf16.msra.mxu0 %v509
    %545 = vmatprep.subr.bf16.mxu0 0
    %546 = vmatpush1.bf16.msra.mxu0 %v510
    %547 = vmatprep.subr.bf16.mxu0 0
    %548 = vmatpush1.bf16.msra.mxu0 %v511
    %549 = vmatprep.subr.bf16.mxu0 0
    %550 = vmatpush1.bf16.msra.mxu0 %v512
    %551 = vmatprep.subr.bf16.mxu0 0
    %552 = vmatpush1.bf16.msra.mxu0 %v513
    %553 = vmatprep.subr.bf16.mxu0 0
    %554 = vmatpush1.bf16.msra.mxu0 %v514
    %555 = vmatprep.subr.bf16.mxu0 0
    %556 = vmatpush1.bf16.msra.mxu0 %v515
    %557 = vmatprep.subr.bf16.mxu0 0
    %558 = vmatpush1.bf16.msra.mxu0 %v516
    %559 = vmatprep.subr.bf16.mxu0 0
    %560 = vmatpush1.bf16.msra.mxu0 %v517
    %561 = vmatprep.subr.bf16.mxu0 0
    %562 = vmatpush1.bf16.msra.mxu0 %v518
    %563 = vmatprep.subr.bf16.mxu0 0
    %564 = vmatpush1.bf16.msra.mxu0 %v519
    %565 = vmatprep.subr.bf16.mxu0 0
    %566 = vmatpush1.bf16.msra.mxu0 %v520
    %567 = vmatprep.subr.bf16.mxu0 0
    %568 = vmatpush1.bf16.msra.mxu0 %v521
    %569 = vmatprep.subr.bf16.mxu0 0
    %570 = vmatpush1.bf16.msra.mxu0 %v522
    %571 = vmatprep.mubr.bf16.mxu0 %v403
    %572 = vmatmul.mubr.bf16.gmra.mrb[0].mxu0 %v402
    %v573 = vpop.f32.mrb[0].mxu0
    %v574 = vadd.f32 %v441, %v573
    %v575 = vpop.f32.mrb[0].mxu0
    %v576 = vpop.f32.mrb[0].mxu0
    %v577 = vpop.f32.mrb[0].mxu0
    %578 = vdwg.mxu0
    %579 = vst [vmem:[%s7] sm:$0xff] %v574
    // Predicated region
    $region42: #{soft_q_forward.1} parent=1 // pred_check
      _
    $region43: #{soft_q_forward.1} parent=1 // pred_check_branch
      %581 = sbr.rel (0) target = $region45
    $region44: #{soft_q_forward.1} parent=1 // pred_region
      _
    $region45: #{soft_q_forward.1} parent=1 // pred_fallthru
      _
    // Predicated region
    $region46: #{soft_q_forward.1} parent=1 // pred_check
      _
    $region47: #{soft_q_forward.1} parent=1 // pred_check_branch
      %583 = sbr.rel (0) target = $region49
    $region48: #{soft_q_forward.1} parent=1 // pred_region
      _
    $region49: #{soft_q_forward.1} parent=1 // pred_fallthru
      _
    %584 = vsyncpa [#allocation3], 1
    %585 = vsyncpa [#allocation5], 1

</llo_original>
